<compile_context>
chip_gen: v5e
topology: v5e:2x2
jax: 0.10.0
libtpu: 0.0.40
codegen_flags: <defaults>
</compile_context>

<pallas_src>
import jax
import jax.numpy as jnp
import numpy as np
from jax.experimental import pallas as pl
from jax.experimental.pallas import tpu as pltpu

BN_EPS = 1e-5
PAD = 128  # lane-dense channel padding (one full vreg lane width)


def gnn_kernel(x_ref, adj_ref, w_ref, wl_ref, vec_ref, out_ref):
    """Whole 3-layer SAGE+BN stack + final linear, all lane-dense 2-D matmuls."""
    h0 = x_ref[...]          # (B*N, PAD)
    adj_bd = adj_ref[...]    # (B*N, B*N) block-diagonal, degree-normalised
    vecs = vec_ref[...]      # (10, PAD): [b1,g1,be1, b2,g2,be2, b3,g3,be3, bl]

    def bn_train(h, gamma, beta):
        # single-pass batch stats: var = E[x^2] - mean^2 (biased, training mode)
        mean = jnp.mean(h, axis=0, keepdims=True)
        ex2 = jnp.mean(h * h, axis=0, keepdims=True)
        var = ex2 - mean * mean
        return (h - mean) * jax.lax.rsqrt(var + BN_EPS) * gamma + beta

    def sage_layer(h, l):
        # neighbour aggregation: one 2-D matmul against the block-diagonal adj
        agg = jnp.dot(adj_bd, h, preferred_element_type=jnp.float32)
        # fused rel/root transform: [agg, h] @ [[W_rel]; [W_root]]
        # (both halves 128-lane aligned; K=256 is one pass on v6e/v7x MXU)
        z = jnp.concatenate([agg, h], axis=-1)                     # (B*N, 2*PAD)
        conv = (jnp.dot(z, w_ref[l], preferred_element_type=jnp.float32)
                + vecs[3 * l:3 * l + 1])
        return bn_train(jnp.maximum(conv, 0.0),
                        vecs[3 * l + 1:3 * l + 2],
                        vecs[3 * l + 2:3 * l + 3])

    x1 = sage_layer(h0, 0)
    x2 = sage_layer(x1, 1)
    x3 = sage_layer(x2, 2)

    # fused final linear: lane-aligned concat (all three chunks 128-wide) then
    # one (B*N, 384) @ (384, PAD) matmul -- never builds a misaligned concat.
    cat = jnp.concatenate([x1, x2, x3], axis=-1)                   # (B*N, 3*PAD)
    lin = jnp.dot(cat, wl_ref[...], preferred_element_type=jnp.float32) + vecs[9:10]
    out_ref[...] = jnp.maximum(lin, 0.0)                           # lane-dense store


def _pad_mat(w):
    ci, co = w.shape
    return jnp.pad(w, ((0, PAD - ci), (0, PAD - co)))


def _pad_row(v):
    return jnp.pad(v, ((0, 0), (0, PAD - v.shape[-1])))


def gnn_forward(x, adj, params, hidden_channels, out_channels):
    """Single-invocation kernel (grid=()): the whole problem fits in VMEM.

    All layout plumbing (channel padding to 128, weight fusion/stacking,
    block-diagonalisation + degree-normalisation of adj, (B,N,C)->(B*N,C)
    flattening) happens here at the wrapper boundary.
    """
    B, N, Cin = x.shape
    BN = B * N
    H, O = hidden_channels, out_channels

    x2d = jnp.pad(x.reshape(BN, Cin), ((0, 0), (0, PAD - Cin)))

    # (adj @ h) / deg == (adj / deg) @ h : fold degree normalisation into adj once,
    # then lay the B batches out block-diagonally so the kernel does 2-D matmuls.
    deg = jnp.sum(adj, axis=-1, keepdims=True)                     # (B, N, 1)
    adj_norm = adj * (1.0 / jnp.maximum(deg, 1.0))                 # (B, N, N)
    eye_b = jnp.eye(B, dtype=adj.dtype)
    adj_bd = jnp.einsum("bc,bij->bicj", eye_b, adj_norm).reshape(BN, BN)

    # Stack the three fused [W_rel; W_root] weights into one (3, 256, 128) array.
    w_stack = jnp.stack([
        jnp.concatenate([_pad_mat(params["w1r"]), _pad_mat(params["w1o"])], axis=0),
        jnp.concatenate([_pad_mat(params["w2r"]), _pad_mat(params["w2o"])], axis=0),
        jnp.concatenate([_pad_mat(params["w3r"]), _pad_mat(params["w3o"])], axis=0),
    ])

    # Final linear weight split per source chunk, padded, and row-stacked so the
    # kernel can apply it as one (BN,384)@(384,128) matmul on the aligned concat.
    wl = params["wl"]
    wl_cat = jnp.concatenate(
        [_pad_mat(wl[:H]), _pad_mat(wl[H:2 * H]), _pad_mat(wl[2 * H:])], axis=0)

    # All (1, PAD) row vectors stacked into one (10, PAD) array.
    vecs = jnp.concatenate([
        _pad_row(params["b1"]), _pad_row(params["g1"]), _pad_row(params["be1"]),
        _pad_row(params["b2"]), _pad_row(params["g2"]), _pad_row(params["be2"]),
        _pad_row(params["b3"]), _pad_row(params["g3"]), _pad_row(params["be3"]),
        _pad_row(params["bl"]),
    ], axis=0)

    flops = int(
        3 * 2 * BN * BN * PAD          # block-diag aggregation (3 layers)
        + 3 * 2 * BN * (2 * PAD) * PAD  # fused rel/root matmul (3 layers)
        + 2 * BN * (3 * PAD) * PAD      # fused final linear
    )
    bytes_accessed = int(4 * (x2d.size + adj_bd.size + w_stack.size
                              + wl_cat.size + vecs.size + BN * PAD))
    cost = pl.CostEstimate(
        flops=flops,
        transcendentals=int(3 * PAD),   # rsqrt per BN channel, 3 layers
        bytes_accessed=bytes_accessed,
    )

    # Single TensorCore on all generations (incl. v7x): sharding BN stats over
    # cores would cost more than the ~12 vregs of compute being split.
    out2d = pl.pallas_call(
        gnn_kernel,
        out_shape=jax.ShapeDtypeStruct((BN, PAD), jnp.float32),
        in_specs=[pl.BlockSpec(memory_space=pltpu.MemorySpace.VMEM)] * 5,
        out_specs=pl.BlockSpec(memory_space=pltpu.MemorySpace.VMEM),
        cost_estimate=cost,
    )(x2d, adj_bd, w_stack, wl_cat, vecs)

    return out2d.reshape(B, N, PAD)[:, :, :O]


def gnn_reference(x, adj, p):
    """Pure-JAX reference (same math, unpadded) for correctness check."""
    deg_inv = 1.0 / jnp.maximum(jnp.sum(adj, -1, keepdims=True), 1.0)

    def sage(h, wr, wo, b):
        agg = jnp.einsum("bij,bjc->bic", adj, h) * deg_inv
        return jnp.einsum("bnc,co->bno", agg, wr) + jnp.einsum("bnc,co->bno", h, wo) + b[None]

    def bn(h, g, be):
        m = jnp.mean(h, axis=(0, 1), keepdims=True)
        v = jnp.mean((h - m) ** 2, axis=(0, 1), keepdims=True)
        return (h - m) / jnp.sqrt(v + BN_EPS) * g[None] + be[None]

    x1 = bn(jax.nn.relu(sage(x, p["w1r"], p["w1o"], p["b1"])), p["g1"], p["be1"])
    x2 = bn(jax.nn.relu(sage(x1, p["w2r"], p["w2o"], p["b2"])), p["g2"], p["be2"])
    x3 = bn(jax.nn.relu(sage(x2, p["w3r"], p["w3o"], p["b3"])), p["g3"], p["be3"])
    cat = jnp.concatenate([x1, x2, x3], axis=-1)
    return jax.nn.relu(jnp.einsum("bnc,co->bno", cat, p["wl"]) + p["bl"][None])


def make_params(key, in_channels, hidden_channels, out_channels):
    ks = jax.random.split(key, 8)
    f32 = jnp.float32

    def lin_w(k, cin, cout):
        return (jax.random.normal(k, (cin, cout), f32) / jnp.sqrt(cin)).astype(f32)

    H, O = hidden_channels, out_channels
    return {
        # conv1: in -> hidden
        "w1r": lin_w(ks[0], in_channels, H),
        "w1o": lin_w(ks[1], in_channels, H),
        "b1": jnp.zeros((1, H), f32) + 0.01,
        "g1": jnp.ones((1, H), f32),
        "be1": jnp.zeros((1, H), f32),
        # conv2: hidden -> hidden
        "w2r": lin_w(ks[2], H, H),
        "w2o": lin_w(ks[3], H, H),
        "b2": jnp.zeros((1, H), f32) + 0.01,
        "g2": jnp.ones((1, H), f32),
        "be2": jnp.zeros((1, H), f32),
        # conv3: hidden -> out
        "w3r": lin_w(ks[4], H, O),
        "w3o": lin_w(ks[5], H, O),
        "b3": jnp.zeros((1, O), f32) + 0.01,
        "g3": jnp.ones((1, O), f32),
        "be3": jnp.zeros((1, O), f32),
        # final linear: (2H + O) -> O
        "wl": lin_w(ks[6], 2 * H + O, O),
        "bl": jnp.zeros((1, O), f32) + 0.01,
    }


if __name__ == "__main__":
    key = jax.random.PRNGKey(0)
    k_x, k_adj, k_p = jax.random.split(key, 3)

    B, N = 2, 16
    in_channels, hidden_channels, out_channels = 8, 16, 8

    x = jax.random.normal(k_x, (B, N, in_channels), jnp.float32)
    # random symmetric dense adjacency (0/1)
    a = (jax.random.uniform(k_adj, (B, N, N)) < 0.3).astype(jnp.float32)
    adj = jnp.maximum(a, jnp.swapaxes(a, -1, -2))

    params = make_params(k_p, in_channels, hidden_channels, out_channels)

    # TODO(synk): optional `mask` argument and eval-mode BatchNorm running
    # stats are not implemented (reference forward uses mask=None, training BN).

    out = gnn_forward(x, adj, params, hidden_channels, out_channels)
    jax.block_until_ready(out)

    ref = gnn_reference(x, adj, params)
    np.testing.assert_allclose(np.asarray(out), np.asarray(ref), rtol=1e-4, atol=1e-4)
    assert out.shape == (B, N, out_channels)

    print("KERNEL_OK")
</pallas_src>

<mosaic_0001>
module attributes {stable_mosaic.version = 11 : i64} {
  func.func @gnn_kernel(%arg0: memref<32x128xf32, #tpu.memory_space<vmem>>, %arg1: memref<32x32xf32, #tpu.memory_space<vmem>>, %arg2: memref<3x256x128xf32, #tpu.memory_space<vmem>>, %arg3: memref<384x128xf32, #tpu.memory_space<vmem>>, %arg4: memref<10x128xf32, #tpu.memory_space<vmem>>, %arg5: memref<32x128xf32, #tpu.memory_space<vmem>>) attributes {dimension_semantics = [], scalar_prefetch = 0 : i64, scratch_operands = 0 : i64, tpu.core_type = #tpu.core_type<tc>} {
    %c0 = arith.constant 0 : index
    %c0_0 = arith.constant 0 : index
    %0 = vector.load %arg0[%c0, %c0_0] : memref<32x128xf32, #tpu.memory_space<vmem>>, vector<32x128xf32>
    %c0_1 = arith.constant 0 : index
    %c0_2 = arith.constant 0 : index
    %1 = vector.load %arg1[%c0_1, %c0_2] : memref<32x32xf32, #tpu.memory_space<vmem>>, vector<32x32xf32>
    %c0_3 = arith.constant 0 : index
    %c0_4 = arith.constant 0 : index
    %2 = vector.load %arg4[%c0_3, %c0_4] : memref<10x128xf32, #tpu.memory_space<vmem>>, vector<10x128xf32>
    %cst = arith.constant dense<0.000000e+00> : vector<32x128xf32>
    %3 = tpu.matmul %1, %0, %cst {dimension_numbers = #tpu.dot_dimension_numbers<[1], [0], [0], [1], [0, 0, 1, 1], [], []>} : vector<32x32xf32>, vector<32x128xf32>, vector<32x128xf32> -> vector<32x128xf32>
    %4 = tpu.concatenate %3, %0 in 1 : vector<32x128xf32>, vector<32x128xf32> -> vector<32x256xf32>
    %c0_5 = arith.constant 0 : index
    %c0_6 = arith.constant 0 : index
    %c0_7 = arith.constant 0 : index
    %5 = vector.load %arg2[%c0_5, %c0_6, %c0_7] : memref<3x256x128xf32, #tpu.memory_space<vmem>>, vector<1x256x128xf32>
    %6 = vector.shape_cast %5 : vector<1x256x128xf32> to vector<256x128xf32>
    %cst_8 = arith.constant dense<0.000000e+00> : vector<32x128xf32>
    %7 = tpu.matmul %4, %6, %cst_8 {dimension_numbers = #tpu.dot_dimension_numbers<[1], [0], [0], [1], [0, 0, 1, 1], [], []>} : vector<32x256xf32>, vector<256x128xf32>, vector<32x128xf32> -> vector<32x128xf32>
    %8 = vector.extract_strided_slice %2 {offsets = [0, 0], sizes = [1, 128], strides = [1, 1]} : vector<10x128xf32> to vector<1x128xf32>
    %9 = vector.broadcast %8 : vector<1x128xf32> to vector<32x128xf32>
    %10 = arith.addf %7, %9 : vector<32x128xf32>
    %cst_9 = arith.constant 0.000000e+00 : f32
    %11 = vector.broadcast %cst_9 : f32 to vector<32x128xf32>
    %12 = arith.maximumf %10, %11 : vector<32x128xf32>
    %13 = vector.extract_strided_slice %2 {offsets = [1, 0], sizes = [1, 128], strides = [1, 1]} : vector<10x128xf32> to vector<1x128xf32>
    %14 = vector.extract_strided_slice %2 {offsets = [2, 0], sizes = [1, 128], strides = [1, 1]} : vector<10x128xf32> to vector<1x128xf32>
    %cst_10 = arith.constant dense<0.000000e+00> : vector<128xf32>
    %15 = vector.multi_reduction <add>, %12, %cst_10 [0] : vector<32x128xf32> to vector<128xf32>
    %16 = vector.shape_cast %15 : vector<128xf32> to vector<1x128xf32>
    %cst_11 = arith.constant 3.200000e+01 : f32
    %17 = vector.broadcast %cst_11 : f32 to vector<1x128xf32>
    %18 = arith.divf %16, %17 : vector<1x128xf32>
    %19 = arith.mulf %12, %12 : vector<32x128xf32>
    %cst_12 = arith.constant dense<0.000000e+00> : vector<128xf32>
    %20 = vector.multi_reduction <add>, %19, %cst_12 [0] : vector<32x128xf32> to vector<128xf32>
    %21 = vector.shape_cast %20 : vector<128xf32> to vector<1x128xf32>
    %cst_13 = arith.constant 3.200000e+01 : f32
    %22 = vector.broadcast %cst_13 : f32 to vector<1x128xf32>
    %23 = arith.divf %21, %22 : vector<1x128xf32>
    %24 = arith.mulf %18, %18 : vector<1x128xf32>
    %25 = arith.subf %23, %24 : vector<1x128xf32>
    %26 = vector.broadcast %18 : vector<1x128xf32> to vector<32x128xf32>
    %27 = arith.subf %12, %26 : vector<32x128xf32>
    %cst_14 = arith.constant 9.99999974E-6 : f32
    %28 = vector.broadcast %cst_14 : f32 to vector<1x128xf32>
    %29 = arith.addf %25, %28 : vector<1x128xf32>
    %30 = math.rsqrt %29 : vector<1x128xf32>
    %31 = vector.broadcast %30 : vector<1x128xf32> to vector<32x128xf32>
    %32 = arith.mulf %27, %31 : vector<32x128xf32>
    %33 = vector.broadcast %13 : vector<1x128xf32> to vector<32x128xf32>
    %34 = arith.mulf %32, %33 : vector<32x128xf32>
    %35 = vector.broadcast %14 : vector<1x128xf32> to vector<32x128xf32>
    %36 = arith.addf %34, %35 : vector<32x128xf32>
    %cst_15 = arith.constant dense<0.000000e+00> : vector<32x128xf32>
    %37 = tpu.matmul %1, %36, %cst_15 {dimension_numbers = #tpu.dot_dimension_numbers<[1], [0], [0], [1], [0, 0, 1, 1], [], []>} : vector<32x32xf32>, vector<32x128xf32>, vector<32x128xf32> -> vector<32x128xf32>
    %38 = tpu.concatenate %37, %36 in 1 : vector<32x128xf32>, vector<32x128xf32> -> vector<32x256xf32>
    %c1 = arith.constant 1 : index
    %c0_16 = arith.constant 0 : index
    %c0_17 = arith.constant 0 : index
    %39 = vector.load %arg2[%c1, %c0_16, %c0_17] : memref<3x256x128xf32, #tpu.memory_space<vmem>>, vector<1x256x128xf32>
    %40 = vector.shape_cast %39 : vector<1x256x128xf32> to vector<256x128xf32>
    %cst_18 = arith.constant dense<0.000000e+00> : vector<32x128xf32>
    %41 = tpu.matmul %38, %40, %cst_18 {dimension_numbers = #tpu.dot_dimension_numbers<[1], [0], [0], [1], [0, 0, 1, 1], [], []>} : vector<32x256xf32>, vector<256x128xf32>, vector<32x128xf32> -> vector<32x128xf32>
    %42 = vector.extract_strided_slice %2 {offsets = [3, 0], sizes = [1, 128], strides = [1, 1]} : vector<10x128xf32> to vector<1x128xf32>
    %43 = vector.broadcast %42 : vector<1x128xf32> to vector<32x128xf32>
    %44 = arith.addf %41, %43 : vector<32x128xf32>
    %cst_19 = arith.constant 0.000000e+00 : f32
    %45 = vector.broadcast %cst_19 : f32 to vector<32x128xf32>
    %46 = arith.maximumf %44, %45 : vector<32x128xf32>
    %47 = vector.extract_strided_slice %2 {offsets = [4, 0], sizes = [1, 128], strides = [1, 1]} : vector<10x128xf32> to vector<1x128xf32>
    %48 = vector.extract_strided_slice %2 {offsets = [5, 0], sizes = [1, 128], strides = [1, 1]} : vector<10x128xf32> to vector<1x128xf32>
    %cst_20 = arith.constant dense<0.000000e+00> : vector<128xf32>
    %49 = vector.multi_reduction <add>, %46, %cst_20 [0] : vector<32x128xf32> to vector<128xf32>
    %50 = vector.shape_cast %49 : vector<128xf32> to vector<1x128xf32>
    %cst_21 = arith.constant 3.200000e+01 : f32
    %51 = vector.broadcast %cst_21 : f32 to vector<1x128xf32>
    %52 = arith.divf %50, %51 : vector<1x128xf32>
    %53 = arith.mulf %46, %46 : vector<32x128xf32>
    %cst_22 = arith.constant dense<0.000000e+00> : vector<128xf32>
    %54 = vector.multi_reduction <add>, %53, %cst_22 [0] : vector<32x128xf32> to vector<128xf32>
    %55 = vector.shape_cast %54 : vector<128xf32> to vector<1x128xf32>
    %cst_23 = arith.constant 3.200000e+01 : f32
    %56 = vector.broadcast %cst_23 : f32 to vector<1x128xf32>
    %57 = arith.divf %55, %56 : vector<1x128xf32>
    %58 = arith.mulf %52, %52 : vector<1x128xf32>
    %59 = arith.subf %57, %58 : vector<1x128xf32>
    %60 = vector.broadcast %52 : vector<1x128xf32> to vector<32x128xf32>
    %61 = arith.subf %46, %60 : vector<32x128xf32>
    %cst_24 = arith.constant 9.99999974E-6 : f32
    %62 = vector.broadcast %cst_24 : f32 to vector<1x128xf32>
    %63 = arith.addf %59, %62 : vector<1x128xf32>
    %64 = math.rsqrt %63 : vector<1x128xf32>
    %65 = vector.broadcast %64 : vector<1x128xf32> to vector<32x128xf32>
    %66 = arith.mulf %61, %65 : vector<32x128xf32>
    %67 = vector.broadcast %47 : vector<1x128xf32> to vector<32x128xf32>
    %68 = arith.mulf %66, %67 : vector<32x128xf32>
    %69 = vector.broadcast %48 : vector<1x128xf32> to vector<32x128xf32>
    %70 = arith.addf %68, %69 : vector<32x128xf32>
    %cst_25 = arith.constant dense<0.000000e+00> : vector<32x128xf32>
    %71 = tpu.matmul %1, %70, %cst_25 {dimension_numbers = #tpu.dot_dimension_numbers<[1], [0], [0], [1], [0, 0, 1, 1], [], []>} : vector<32x32xf32>, vector<32x128xf32>, vector<32x128xf32> -> vector<32x128xf32>
    %72 = tpu.concatenate %71, %70 in 1 : vector<32x128xf32>, vector<32x128xf32> -> vector<32x256xf32>
    %c2 = arith.constant 2 : index
    %c0_26 = arith.constant 0 : index
    %c0_27 = arith.constant 0 : index
    %73 = vector.load %arg2[%c2, %c0_26, %c0_27] : memref<3x256x128xf32, #tpu.memory_space<vmem>>, vector<1x256x128xf32>
    %74 = vector.shape_cast %73 : vector<1x256x128xf32> to vector<256x128xf32>
    %cst_28 = arith.constant dense<0.000000e+00> : vector<32x128xf32>
    %75 = tpu.matmul %72, %74, %cst_28 {dimension_numbers = #tpu.dot_dimension_numbers<[1], [0], [0], [1], [0, 0, 1, 1], [], []>} : vector<32x256xf32>, vector<256x128xf32>, vector<32x128xf32> -> vector<32x128xf32>
    %76 = vector.extract_strided_slice %2 {offsets = [6, 0], sizes = [1, 128], strides = [1, 1]} : vector<10x128xf32> to vector<1x128xf32>
    %77 = vector.broadcast %76 : vector<1x128xf32> to vector<32x128xf32>
    %78 = arith.addf %75, %77 : vector<32x128xf32>
    %cst_29 = arith.constant 0.000000e+00 : f32
    %79 = vector.broadcast %cst_29 : f32 to vector<32x128xf32>
    %80 = arith.maximumf %78, %79 : vector<32x128xf32>
    %81 = vector.extract_strided_slice %2 {offsets = [7, 0], sizes = [1, 128], strides = [1, 1]} : vector<10x128xf32> to vector<1x128xf32>
    %82 = vector.extract_strided_slice %2 {offsets = [8, 0], sizes = [1, 128], strides = [1, 1]} : vector<10x128xf32> to vector<1x128xf32>
    %cst_30 = arith.constant dense<0.000000e+00> : vector<128xf32>
    %83 = vector.multi_reduction <add>, %80, %cst_30 [0] : vector<32x128xf32> to vector<128xf32>
    %84 = vector.shape_cast %83 : vector<128xf32> to vector<1x128xf32>
    %cst_31 = arith.constant 3.200000e+01 : f32
    %85 = vector.broadcast %cst_31 : f32 to vector<1x128xf32>
    %86 = arith.divf %84, %85 : vector<1x128xf32>
    %87 = arith.mulf %80, %80 : vector<32x128xf32>
    %cst_32 = arith.constant dense<0.000000e+00> : vector<128xf32>
    %88 = vector.multi_reduction <add>, %87, %cst_32 [0] : vector<32x128xf32> to vector<128xf32>
    %89 = vector.shape_cast %88 : vector<128xf32> to vector<1x128xf32>
    %cst_33 = arith.constant 3.200000e+01 : f32
    %90 = vector.broadcast %cst_33 : f32 to vector<1x128xf32>
    %91 = arith.divf %89, %90 : vector<1x128xf32>
    %92 = arith.mulf %86, %86 : vector<1x128xf32>
    %93 = arith.subf %91, %92 : vector<1x128xf32>
    %94 = vector.broadcast %86 : vector<1x128xf32> to vector<32x128xf32>
    %95 = arith.subf %80, %94 : vector<32x128xf32>
    %cst_34 = arith.constant 9.99999974E-6 : f32
    %96 = vector.broadcast %cst_34 : f32 to vector<1x128xf32>
    %97 = arith.addf %93, %96 : vector<1x128xf32>
    %98 = math.rsqrt %97 : vector<1x128xf32>
    %99 = vector.broadcast %98 : vector<1x128xf32> to vector<32x128xf32>
    %100 = arith.mulf %95, %99 : vector<32x128xf32>
    %101 = vector.broadcast %81 : vector<1x128xf32> to vector<32x128xf32>
    %102 = arith.mulf %100, %101 : vector<32x128xf32>
    %103 = vector.broadcast %82 : vector<1x128xf32> to vector<32x128xf32>
    %104 = arith.addf %102, %103 : vector<32x128xf32>
    %105 = tpu.concatenate %36, %70, %104 in 1 : vector<32x128xf32>, vector<32x128xf32>, vector<32x128xf32> -> vector<32x384xf32>
    %c0_35 = arith.constant 0 : index
    %c0_36 = arith.constant 0 : index
    %106 = vector.load %arg3[%c0_35, %c0_36] : memref<384x128xf32, #tpu.memory_space<vmem>>, vector<384x128xf32>
    %cst_37 = arith.constant dense<0.000000e+00> : vector<32x128xf32>
    %107 = tpu.matmul %105, %106, %cst_37 {dimension_numbers = #tpu.dot_dimension_numbers<[1], [0], [0], [1], [0, 0, 1, 1], [], []>} : vector<32x384xf32>, vector<384x128xf32>, vector<32x128xf32> -> vector<32x128xf32>
    %108 = vector.extract_strided_slice %2 {offsets = [9, 0], sizes = [1, 128], strides = [1, 1]} : vector<10x128xf32> to vector<1x128xf32>
    %109 = vector.broadcast %108 : vector<1x128xf32> to vector<32x128xf32>
    %110 = arith.addf %107, %109 : vector<32x128xf32>
    %cst_38 = arith.constant 0.000000e+00 : f32
    %111 = vector.broadcast %cst_38 : f32 to vector<32x128xf32>
    %112 = arith.maximumf %110, %111 : vector<32x128xf32>
    %c0_39 = arith.constant 0 : index
    %c0_40 = arith.constant 0 : index
    %113 = vector.load %arg5[%c0_39, %c0_40] : memref<32x128xf32, #tpu.memory_space<vmem>>, vector<32x128xf32>
    tpu.vector_store %arg5[%c0_39, %c0_40], %112 {strides = array<i32>} : memref<32x128xf32, #tpu.memory_space<vmem>>, vector<32x128xf32>,
    return
  }
}

</mosaic_0001>

<llo_original>
// kernel: tpu_custom_call.1
$region0: #{tpu_custom_call.1}
  #allocation0 [shape = 'u32[]', space=smem, size = 0x4, offset = 0x4, fixed_abs, tag = 'smem constant byte address 0x4 - core index']
  #allocation1 [shape = 'u32[72,128]{1,0:T(1,128)}', space=vmem, size = 0x9000, scoped, tag = 'internal scratch']
  %s0 = inlined_call_operand.hbm [shape: f32[32,128], index: 0, kind: input, shape index: {}]
  %s1 = inlined_call_operand.hbm [shape: f32[32,32], index: 1, kind: input, shape index: {}]
  %s2 = inlined_call_operand.hbm [shape: f32[3,256,128], index: 2, kind: input, shape index: {}]
  %s3 = inlined_call_operand.hbm [shape: f32[384,128], index: 3, kind: input, shape index: {}]
  %s4 = inlined_call_operand.hbm [shape: f32[10,128], index: 4, kind: input, shape index: {}]
  %s5 = inlined_call_operand.hbm [shape: f32[32,128], index: 5, kind: output, shape index: {}]
  %s6 = sld [smem:[#allocation0]]
  $region50: #{tpu_custom_call.1} parent=0
    _
  %s8 = ssub.s32 1, %s6
  %s9 = scalar_select 0, %s8, %s6
  $region1: #{tpu_custom_call.1} parent=0
    #allocation2 [shape = 'u8[16384]{0}', space=vmem, size = 0x4000, scoped, tag = 'input window, operand 0, single buffered']
    #allocation3 [shape = 's32[1]{0}', space=sflag, size = 0x4, scoped, tag = 'scoped memory for tpu_custom_call.1']
    #allocation4 [shape = 's32[1]{0}', space=sflag, size = 0x4, scoped, tag = 'scoped memory for tpu_custom_call.1']
    #allocation5 [shape = 'u8[16384]{0}', space=vmem, size = 0x4000, scoped, tag = 'input window, operand 1, single buffered']
    #allocation6 [shape = 's32[1]{0}', space=sflag, size = 0x4, scoped, tag = 'scoped memory for tpu_custom_call.1']
    #allocation7 [shape = 'u8[393216]{0}', space=vmem, size = 0x60000, scoped, tag = 'input window, operand 2, single buffered']
    #allocation8 [shape = 'u8[196608]{0}', space=vmem, size = 0x30000, scoped, tag = 'input window, operand 3, single buffered']
    #allocation9 [shape = 's32[1]{0}', space=sflag, size = 0x4, scoped, tag = 'scoped memory for tpu_custom_call.1']
    #allocation10 [shape = 'u8[8192]{0}', space=vmem, size = 0x2000, scoped, tag = 'input window, operand 4, single buffered']
    #allocation11 [shape = 'u8[16384]{0}', space=vmem, size = 0x4000, scoped, tag = 'output window, operand 0, single buffered']
    %10 = vsyncpa [#allocation3], 0
    %11 = vsyncpa [#allocation6], 0
    %12 = vsyncpa [#allocation9], 0
    %13 = vsyncpa [#allocation4], 0
    // Predicated region
    $region2: #{tpu_custom_call.1} parent=1 // pred_check
      _
    $region3: #{tpu_custom_call.1} parent=1 // pred_check_branch
      %15 = sbr.rel (0) target = $region5
    $region4: #{tpu_custom_call.1} parent=1 // pred_region
      %17 = vsyncadd [#allocation3], 0
      %s18 = sshll.u32 %s0, 4
      %s19 = int_to_ptr.hbm [resolvable:$true] %s18
      %s20 = sshll.u32 [#allocation2], 4
      %s21 = int_to_ptr.vmem [resolvable:$true] %s20
      %26 = dma.hbm_to_vmem [thread:$0]  %s19, 512, %s21, [#allocation3], 128, 128, 8
    $region5: #{tpu_custom_call.1} parent=1 // pred_fallthru
      _
    // Predicated region
    $region6: #{tpu_custom_call.1} parent=1 // pred_check
      _
    $region7: #{tpu_custom_call.1} parent=1 // pred_check_branch
      %28 = sbr.rel (0) target = $region9
    $region8: #{tpu_custom_call.1} parent=1 // pred_region
      %30 = vsyncadd [#allocation6], 0
      %s31 = sshll.u32 %s1, 4
      %s32 = int_to_ptr.hbm [resolvable:$true] %s31
      %s33 = sshll.u32 [#allocation5], 4
      %s34 = int_to_ptr.vmem [resolvable:$true] %s33
      %39 = dma.hbm_to_vmem [thread:$0]  %s32, 512, %s34, [#allocation6], 128, 128, 8
    $region9: #{tpu_custom_call.1} parent=1 // pred_fallthru
      _
    // Predicated region
    $region10: #{tpu_custom_call.1} parent=1 // pred_check
      _
    $region11: #{tpu_custom_call.1} parent=1 // pred_check_branch
      %41 = sbr.rel (0) target = $region13
    $region12: #{tpu_custom_call.1} parent=1 // pred_region
      %43 = vsyncadd [#allocation6], 0
      %s44 = sshll.u32 %s2, 4
      %s45 = int_to_ptr.hbm [resolvable:$true] %s44
      %s46 = sshll.u32 [#allocation7], 4
      %s47 = int_to_ptr.vmem [resolvable:$true] %s46
      %52 = dma.hbm_to_vmem [thread:$0]  %s45, 12288, %s47, [#allocation6], 128, 128, 8
    $region13: #{tpu_custom_call.1} parent=1 // pred_fallthru
      _
    // Predicated region
    $region14: #{tpu_custom_call.1} parent=1 // pred_check
      _
    $region15: #{tpu_custom_call.1} parent=1 // pred_check_branch
      %54 = sbr.rel (0) target = $region17
    $region16: #{tpu_custom_call.1} parent=1 // pred_region
      %56 = vsyncadd [#allocation9], 0
      %s57 = sshll.u32 %s3, 4
      %s58 = int_to_ptr.hbm [resolvable:$true] %s57
      %s59 = sshll.u32 [#allocation8], 4
      %s60 = int_to_ptr.vmem [resolvable:$true] %s59
      %65 = dma.hbm_to_vmem [thread:$0]  %s58, 6144, %s60, [#allocation9], 128, 128, 8
    $region17: #{tpu_custom_call.1} parent=1 // pred_fallthru
      _
    // Predicated region
    $region18: #{tpu_custom_call.1} parent=1 // pred_check
      _
    $region19: #{tpu_custom_call.1} parent=1 // pred_check_branch
      %67 = sbr.rel (0) target = $region21
    $region20: #{tpu_custom_call.1} parent=1 // pred_region
      %69 = vsyncadd [#allocation9], 0
      %s70 = sshll.u32 %s4, 4
      %s71 = int_to_ptr.hbm [resolvable:$true] %s70
      %s72 = sshll.u32 [#allocation10], 4
      %s73 = int_to_ptr.vmem [resolvable:$true] %s72
      %78 = dma.hbm_to_vmem [thread:$0]  %s71, 256, %s73, [#allocation9], 128, 128, 8
    $region21: #{tpu_custom_call.1} parent=1 // pred_fallthru
      _
    // Predicated region
    $region22: #{tpu_custom_call.1} parent=1 // pred_check
      _
    $region23: #{tpu_custom_call.1} parent=1 // pred_check_branch
      %80 = sbr.rel (0) target = $region25
    $region24: #{tpu_custom_call.1} parent=1 // pred_region
      %82 = dma.done [#allocation3], 512
    $region25: #{tpu_custom_call.1} parent=1 // pred_fallthru
      _
    // Predicated region
    $region26: #{tpu_custom_call.1} parent=1 // pred_check
      _
    $region27: #{tpu_custom_call.1} parent=1 // pred_check_branch
      %84 = sbr.rel (0) target = $region29
    $region28: #{tpu_custom_call.1} parent=1 // pred_region
      %86 = dma.done [#allocation6], 512
    $region29: #{tpu_custom_call.1} parent=1 // pred_fallthru
      _
    // Predicated region
    $region30: #{tpu_custom_call.1} parent=1 // pred_check
      _
    $region31: #{tpu_custom_call.1} parent=1 // pred_check_branch
      %88 = sbr.rel (0) target = $region33
    $region32: #{tpu_custom_call.1} parent=1 // pred_region
      %90 = dma.done [#allocation6], 12288
    $region33: #{tpu_custom_call.1} parent=1 // pred_fallthru
      _
    // Predicated region
    $region34: #{tpu_custom_call.1} parent=1 // pred_check
      _
    $region35: #{tpu_custom_call.1} parent=1 // pred_check_branch
      %92 = sbr.rel (0) target = $region37
    $region36: #{tpu_custom_call.1} parent=1 // pred_region
      %94 = dma.done [#allocation9], 6144
    $region37: #{tpu_custom_call.1} parent=1 // pred_fallthru
      _
    // Predicated region
    $region38: #{tpu_custom_call.1} parent=1 // pred_check
      _
    $region39: #{tpu_custom_call.1} parent=1 // pred_check_branch
      %96 = sbr.rel (0) target = $region41
    $region40: #{tpu_custom_call.1} parent=1 // pred_region
      %98 = dma.done [#allocation9], 256
    $region41: #{tpu_custom_call.1} parent=1 // pred_fallthru
      _
    %v99 = vld [vmem:[#allocation2] sm:$0xff]
    %v100 = vld [vmem:[#allocation2 + $0x8] sm:$0xff]
    %v101 = vld [vmem:[#allocation2 + $0x10] sm:$0xff]
    %v102 = vld [vmem:[#allocation2 + $0x18] sm:$0xff]
    %v103 = vld [vmem:[#allocation5] sm:$0xff]
    %v104 = vld [vmem:[#allocation5 + $0x8] sm:$0xff]
    %v105 = vld [vmem:[#allocation5 + $0x10] sm:$0xff]
    %v106 = vld [vmem:[#allocation5 + $0x18] sm:$0xff]
    %v107 = vld [vmem:[#allocation10] sm:$0xff]
    %v108 = vld [vmem:[#allocation10 + $0x8] sm:$0x3]
    %vm109 = vcmask 261120
    %v111 = vsel %vm109, %v103, 0
    %v114 = vsel %vm109, %v104, 0
    %v117 = vsel %vm109, %v105, 0
    %v120 = vsel %vm109, %v106, 0
    %122 = vmatpush.msra.mxu0 0.0
    %123 = vmatpush.msra.mxu0 0.0
    %124 = vmatpush.msra.mxu0 0.0
    %125 = vmatpush.msra.mxu0 0.0
    %126 = vmatpush.msra.mxu0 0.0
    %127 = vmatpush.msra.mxu0 0.0
    %128 = vmatpush.msra.mxu0 0.0
    %129 = vmatpush.msra.mxu0 0.0
    %130 = vmatpush.msra.mxu0 0.0
    %131 = vmatpush.msra.mxu0 0.0
    %132 = vmatpush.msra.mxu0 0.0
    %133 = vmatpush.msra.mxu0 0.0
    %134 = vmatpush.msra.mxu0 %v102
    %135 = vmatpush.msra.mxu0 %v101
    %136 = vmatpush.msra.mxu0 %v100
    %137 = vmatpush.msra.mxu0 %v99
    %138 = vmatmul.f32.gmra.mxu0 %v111
    %v139 = vpop.f32.mrf.mxu0
    %v140 = vadd.f32 0.0, %v139
    %141 = vmatmul.f32.gmra.mxu0 %v114
    %v142 = vpop.f32.mrf.mxu0
    %v143 = vadd.f32 0.0, %v142
    %144 = vmatmul.f32.gmra.mxu0 %v117
    %v145 = vpop.f32.mrf.mxu0
    %v146 = vadd.f32 0.0, %v145
    %147 = vmatmul.f32.gmra.mxu0 %v120
    %v148 = vpop.f32.mrf.mxu0
    %v149 = vadd.f32 0.0, %v148
    %150 = vdwg.mxu0
    %v151 = vld [vmem:[#allocation7] sm:$0xff]
    %v152 = vld [vmem:[#allocation7 + $0x8] sm:$0xff]
    %v153 = vld [vmem:[#allocation7 + $0x10] sm:$0xff]
    %v154 = vld [vmem:[#allocation7 + $0x18] sm:$0xff]
    %v155 = vld [vmem:[#allocation7 + $0x20] sm:$0xff]
    %v156 = vld [vmem:[#allocation7 + $0x28] sm:$0xff]
    %v157 = vld [vmem:[#allocation7 + $0x30] sm:$0xff]
    %v158 = vld [vmem:[#allocation7 + $0x38] sm:$0xff]
    %v159 = vld [vmem:[#allocation7 + $0x40] sm:$0xff]
    %v160 = vld [vmem:[#allocation7 + $0x48] sm:$0xff]
    %v161 = vld [vmem:[#allocation7 + $0x50] sm:$0xff]
    %v162 = vld [vmem:[#allocation7 + $0x58] sm:$0xff]
    %v163 = vld [vmem:[#allocation7 + $0x60] sm:$0xff]
    %v164 = vld [vmem:[#allocation7 + $0x68] sm:$0xff]
    %v165 = vld [vmem:[#allocation7 + $0x70] sm:$0xff]
    %v166 = vld [vmem:[#allocation7 + $0x78] sm:$0xff]
    %v167 = vld [vmem:[#allocation7 + $0x80] sm:$0xff]
    %v168 = vld [vmem:[#allocation7 + $0x88] sm:$0xff]
    %v169 = vld [vmem:[#allocation7 + $0x90] sm:$0xff]
    %v170 = vld [vmem:[#allocation7 + $0x98] sm:$0xff]
    %v171 = vld [vmem:[#allocation7 + $0xa0] sm:$0xff]
    %v172 = vld [vmem:[#allocation7 + $0xa8] sm:$0xff]
    %v173 = vld [vmem:[#allocation7 + $0xb0] sm:$0xff]
    %v174 = vld [vmem:[#allocation7 + $0xb8] sm:$0xff]
    %v175 = vld [vmem:[#allocation7 + $0xc0] sm:$0xff]
    %v176 = vld [vmem:[#allocation7 + $0xc8] sm:$0xff]
    %v177 = vld [vmem:[#allocation7 + $0xd0] sm:$0xff]
    %v178 = vld [vmem:[#allocation7 + $0xd8] sm:$0xff]
    %v179 = vld [vmem:[#allocation7 + $0xe0] sm:$0xff]
    %v180 = vld [vmem:[#allocation7 + $0xe8] sm:$0xff]
    %v181 = vld [vmem:[#allocation7 + $0xf0] sm:$0xff]
    %v182 = vld [vmem:[#allocation7 + $0xf8] sm:$0xff]
    %v183 = vperm.slane %v107, 0
    %184 = vmatpush.msra.mxu0 %v166
    %185 = vmatpush.msra.mxu0 %v165
    %186 = vmatpush.msra.mxu0 %v164
    %187 = vmatpush.msra.mxu0 %v163
    %188 = vmatpush.msra.mxu0 %v162
    %189 = vmatpush.msra.mxu0 %v161
    %190 = vmatpush.msra.mxu0 %v160
    %191 = vmatpush.msra.mxu0 %v159
    %192 = vmatpush.msra.mxu0 %v158
    %193 = vmatpush.msra.mxu0 %v157
    %194 = vmatpush.msra.mxu0 %v156
    %195 = vmatpush.msra.mxu0 %v155
    %196 = vmatpush.msra.mxu0 %v154
    %197 = vmatpush.msra.mxu0 %v153
    %198 = vmatpush.msra.mxu0 %v152
    %199 = vmatpush.msra.mxu0 %v151
    %200 = vmatmul.f32.gmra.mxu0 %v140
    %v201 = vpop.f32.mrf.mxu0
    %v202 = vadd.f32 %v183, %v201
    %203 = vmatmul.f32.gmra.mxu0 %v143
    %v204 = vpop.f32.mrf.mxu0
    %v205 = vadd.f32 %v183, %v204
    %206 = vmatmul.f32.gmra.mxu0 %v146
    %v207 = vpop.f32.mrf.mxu0
    %v208 = vadd.f32 %v183, %v207
    %209 = vmatmul.f32.gmra.mxu0 %v149
    %v210 = vpop.f32.mrf.mxu0
    %v211 = vadd.f32 %v183, %v210
    %212 = vdwg.mxu0
    %213 = vmatpush.msra.mxu0 %v182
    %214 = vmatpush.msra.mxu0 %v181
    %215 = vmatpush.msra.mxu0 %v180
    %216 = vmatpush.msra.mxu0 %v179
    %217 = vmatpush.msra.mxu0 %v178
    %218 = vmatpush.msra.mxu0 %v177
    %219 = vmatpush.msra.mxu0 %v176
    %220 = vmatpush.msra.mxu0 %v175
    %221 = vmatpush.msra.mxu0 %v174
    %222 = vmatpush.msra.mxu0 %v173
    %223 = vmatpush.msra.mxu0 %v172
    %224 = vmatpush.msra.mxu0 %v171
    %225 = vmatpush.msra.mxu0 %v170
    %226 = vmatpush.msra.mxu0 %v169
    %227 = vmatpush.msra.mxu0 %v168
    %228 = vmatpush.msra.mxu0 %v167
    %229 = vmatmul.f32.gmra.mxu0 %v99
    %v230 = vpop.f32.mrf.mxu0
    %v231 = vadd.f32 %v202, %v230
    %232 = vmatmul.f32.gmra.mxu0 %v100
    %v233 = vpop.f32.mrf.mxu0
    %v234 = vadd.f32 %v205, %v233
    %235 = vmatmul.f32.gmra.mxu0 %v101
    %v236 = vpop.f32.mrf.mxu0
    %v237 = vadd.f32 %v208, %v236
    %238 = vmatmul.f32.gmra.mxu0 %v102
    %v239 = vpop.f32.mrf.mxu0
    %v240 = vadd.f32 %v211, %v239
    %241 = vdwg.mxu0
    %v242 = vmax.f32 %v231, 0.0
    %v243 = vmax.f32 %v234, 0.0
    %v244 = vmax.f32 %v237, 0.0
    %v245 = vmax.f32 %v240, 0.0
    %v246 = vadd.f32 %v242, %v243
    %v247 = vadd.f32 %v246, %v244
    %v248 = vadd.f32 %v247, %v245
    %v249 = vrot.slane %v248, 4
    %v250 = vadd.f32 %v248, %v249
    %v251 = vrot.slane %v250, 2
    %v252 = vadd.f32 %v250, %v251
    %v253 = vrot.slane %v252, 1
    %v254 = vadd.f32 %v252, %v253
    %v255 = vrcp.pop 32.0
    %v256 = vmul.f32 32.0, %v255
    %v257 = vsub.f32 1.0, %v256
    %v258 = vmul.f32 %v255, %v257
    %v259 = vadd.f32 %v255, %v258
    %vm260 = vweird.f32 %v255
    %v261 = vsel %vm260, %v255, %v259
    %v262 = vmul.f32 %v254, %v261
    %v263 = vmul.f32 %v242, %v242
    %v264 = vmul.f32 %v243, %v243
    %v265 = vmul.f32 %v244, %v244
    %v266 = vmul.f32 %v245, %v245
    %v267 = vadd.f32 %v263, %v264
    %v268 = vadd.f32 %v267, %v265
    %v269 = vadd.f32 %v268, %v266
    %v270 = vrot.slane %v269, 4
    %v271 = vadd.f32 %v269, %v270
    %v272 = vrot.slane %v271, 2
    %v273 = vadd.f32 %v271, %v272
    %v274 = vrot.slane %v273, 1
    %v275 = vadd.f32 %v273, %v274
    %v276 = vmul.f32 %v275, %v261
    %v277 = vmul.f32 %v262, %v262
    %v278 = vsub.f32 %v276, %v277
    %v279 = vsub.f32 %v242, %v262
    %v280 = vsub.f32 %v243, %v262
    %v281 = vsub.f32 %v244, %v262
    %v282 = vsub.f32 %v245, %v262
    %v283 = vadd.f32 %v278, 1e-05
    %v284 = vrsqrt.pop %v283
    %v285 = vmul.f32 %v284, %v283
    %v286 = vmul.f32 %v285, %v284
    %v287 = vmul.f32 0.5, %v286
    %v288 = vsub.f32 1.5, %v287
    %v289 = vmul.f32 %v284, %v288
    %vm290 = vweird.f32 %v283
    %vm291 = vweird.f32 %v284
    %vm292 = vmor %vm290, %vm291
    %v293 = vsel %vm292, %v284, %v289
    %v294 = vmul.f32 %v279, %v293
    %v295 = vmul.f32 %v280, %v293
    %v296 = vmul.f32 %v281, %v293
    %v297 = vmul.f32 %v282, %v293
    %v298 = vperm.slane %v107, 1
    %v299 = vmul.f32 %v294, %v298
    %v300 = vmul.f32 %v295, %v298
    %v301 = vmul.f32 %v296, %v298
    %v302 = vmul.f32 %v297, %v298
    %v303 = vperm.slane %v107, 2
    %v304 = vadd.f32 %v299, %v303
    %v305 = vadd.f32 %v300, %v303
    %v306 = vadd.f32 %v301, %v303
    %v307 = vadd.f32 %v302, %v303
    %308 = vmatpush.msra.mxu0 0.0
    %309 = vmatpush.msra.mxu0 0.0
    %310 = vmatpush.msra.mxu0 0.0
    %311 = vmatpush.msra.mxu0 0.0
    %312 = vmatpush.msra.mxu0 0.0
    %313 = vmatpush.msra.mxu0 0.0
    %314 = vmatpush.msra.mxu0 0.0
    %315 = vmatpush.msra.mxu0 0.0
    %316 = vmatpush.msra.mxu0 0.0
    %317 = vmatpush.msra.mxu0 0.0
    %318 = vmatpush.msra.mxu0 0.0
    %319 = vmatpush.msra.mxu0 0.0
    %320 = vmatpush.msra.mxu0 %v307
    %321 = vmatpush.msra.mxu0 %v306
    %322 = vmatpush.msra.mxu0 %v305
    %323 = vmatpush.msra.mxu0 %v304
    %324 = vmatmul.f32.gmra.mxu0 %v111
    %v325 = vpop.f32.mrf.mxu0
    %v326 = vadd.f32 0.0, %v325
    %327 = vmatmul.f32.gmra.mxu0 %v114
    %v328 = vpop.f32.mrf.mxu0
    %v329 = vadd.f32 0.0, %v328
    %330 = vmatmul.f32.gmra.mxu0 %v117
    %v331 = vpop.f32.mrf.mxu0
    %v332 = vadd.f32 0.0, %v331
    %333 = vmatmul.f32.gmra.mxu0 %v120
    %v334 = vpop.f32.mrf.mxu0
    %v335 = vadd.f32 0.0, %v334
    %336 = vdwg.mxu0
    %s337 = scalar_lea.vmem [#allocation7], 256
    %v338 = vld [vmem:[%s337] sm:$0xff]
    %v339 = vld [vmem:[%s337 + $0x8] sm:$0xff]
    %v340 = vld [vmem:[%s337 + $0x10] sm:$0xff]
    %v341 = vld [vmem:[%s337 + $0x18] sm:$0xff]
    %v342 = vld [vmem:[%s337 + $0x20] sm:$0xff]
    %v343 = vld [vmem:[%s337 + $0x28] sm:$0xff]
    %v344 = vld [vmem:[%s337 + $0x30] sm:$0xff]
    %v345 = vld [vmem:[%s337 + $0x38] sm:$0xff]
    %v346 = vld [vmem:[%s337 + $0x40] sm:$0xff]
    %v347 = vld [vmem:[%s337 + $0x48] sm:$0xff]
    %v348 = vld [vmem:[%s337 + $0x50] sm:$0xff]
    %v349 = vld [vmem:[%s337 + $0x58] sm:$0xff]
    %v350 = vld [vmem:[%s337 + $0x60] sm:$0xff]
    %v351 = vld [vmem:[%s337 + $0x68] sm:$0xff]
    %v352 = vld [vmem:[%s337 + $0x70] sm:$0xff]
    %v353 = vld [vmem:[%s337 + $0x78] sm:$0xff]
    %v354 = vld [vmem:[%s337 + $0x80] sm:$0xff]
    %v355 = vld [vmem:[%s337 + $0x88] sm:$0xff]
    %v356 = vld [vmem:[%s337 + $0x90] sm:$0xff]
    %v357 = vld [vmem:[%s337 + $0x98] sm:$0xff]
    %v358 = vld [vmem:[%s337 + $0xa0] sm:$0xff]
    %v359 = vld [vmem:[%s337 + $0xa8] sm:$0xff]
    %v360 = vld [vmem:[%s337 + $0xb0] sm:$0xff]
    %v361 = vld [vmem:[%s337 + $0xb8] sm:$0xff]
    %v362 = vld [vmem:[%s337 + $0xc0] sm:$0xff]
    %v363 = vld [vmem:[%s337 + $0xc8] sm:$0xff]
    %v364 = vld [vmem:[%s337 + $0xd0] sm:$0xff]
    %v365 = vld [vmem:[%s337 + $0xd8] sm:$0xff]
    %v366 = vld [vmem:[%s337 + $0xe0] sm:$0xff]
    %v367 = vld [vmem:[%s337 + $0xe8] sm:$0xff]
    %v368 = vld [vmem:[%s337 + $0xf0] sm:$0xff]
    %v369 = vld [vmem:[%s337 + $0xf8] sm:$0xff]
    %v370 = vperm.slane %v107, 3
    %371 = vmatpush.msra.mxu0 %v353
    %372 = vmatpush.msra.mxu0 %v352
    %373 = vmatpush.msra.mxu0 %v351
    %374 = vmatpush.msra.mxu0 %v350
    %375 = vmatpush.msra.mxu0 %v349
    %376 = vmatpush.msra.mxu0 %v348
    %377 = vmatpush.msra.mxu0 %v347
    %378 = vmatpush.msra.mxu0 %v346
    %379 = vmatpush.msra.mxu0 %v345
    %380 = vmatpush.msra.mxu0 %v344
    %381 = vmatpush.msra.mxu0 %v343
    %382 = vmatpush.msra.mxu0 %v342
    %383 = vmatpush.msra.mxu0 %v341
    %384 = vmatpush.msra.mxu0 %v340
    %385 = vmatpush.msra.mxu0 %v339
    %386 = vmatpush.msra.mxu0 %v338
    %387 = vmatmul.f32.gmra.mxu0 %v326
    %v388 = vpop.f32.mrf.mxu0
    %v389 = vadd.f32 %v370, %v388
    %390 = vmatmul.f32.gmra.mxu0 %v329
    %v391 = vpop.f32.mrf.mxu0
    %v392 = vadd.f32 %v370, %v391
    %393 = vmatmul.f32.gmra.mxu0 %v332
    %v394 = vpop.f32.mrf.mxu0
    %v395 = vadd.f32 %v370, %v394
    %396 = vmatmul.f32.gmra.mxu0 %v335
    %v397 = vpop.f32.mrf.mxu0
    %v398 = vadd.f32 %v370, %v397
    %399 = vdwg.mxu0
    %400 = vmatpush.msra.mxu0 %v369
    %401 = vmatpush.msra.mxu0 %v368
    %402 = vmatpush.msra.mxu0 %v367
    %403 = vmatpush.msra.mxu0 %v366
    %404 = vmatpush.msra.mxu0 %v365
    %405 = vmatpush.msra.mxu0 %v364
    %406 = vmatpush.msra.mxu0 %v363
    %407 = vmatpush.msra.mxu0 %v362
    %408 = vmatpush.msra.mxu0 %v361
    %409 = vmatpush.msra.mxu0 %v360
    %410 = vmatpush.msra.mxu0 %v359
    %411 = vmatpush.msra.mxu0 %v358
    %412 = vmatpush.msra.mxu0 %v357
    %413 = vmatpush.msra.mxu0 %v356
    %414 = vmatpush.msra.mxu0 %v355
    %415 = vmatpush.msra.mxu0 %v354
    %416 = vmatmul.f32.gmra.mxu0 %v304
    %v417 = vpop.f32.mrf.mxu0
    %v418 = vadd.f32 %v389, %v417
    %419 = vmatmul.f32.gmra.mxu0 %v305
    %v420 = vpop.f32.mrf.mxu0
    %v421 = vadd.f32 %v392, %v420
    %422 = vmatmul.f32.gmra.mxu0 %v306
    %v423 = vpop.f32.mrf.mxu0
    %v424 = vadd.f32 %v395, %v423
    %425 = vmatmul.f32.gmra.mxu0 %v307
    %v426 = vpop.f32.mrf.mxu0
    %v427 = vadd.f32 %v398, %v426
    %428 = vdwg.mxu0
    %v429 = vmax.f32 %v418, 0.0
    %v430 = vmax.f32 %v421, 0.0
    %v431 = vmax.f32 %v424, 0.0
    %v432 = vmax.f32 %v427, 0.0
    %v433 = vadd.f32 %v429, %v430
    %v434 = vadd.f32 %v433, %v431
    %v435 = vadd.f32 %v434, %v432
    %v436 = vrot.slane %v435, 4
    %v437 = vadd.f32 %v435, %v436
    %v438 = vrot.slane %v437, 2
    %v439 = vadd.f32 %v437, %v438
    %v440 = vrot.slane %v439, 1
    %v441 = vadd.f32 %v439, %v440
    %v442 = vmul.f32 %v441, %v261
    %v443 = vmul.f32 %v429, %v429
    %v444 = vmul.f32 %v430, %v430
    %v445 = vmul.f32 %v431, %v431
    %v446 = vmul.f32 %v432, %v432
    %v447 = vadd.f32 %v443, %v444
    %v448 = vadd.f32 %v447, %v445
    %v449 = vadd.f32 %v448, %v446
    %v450 = vrot.slane %v449, 4
    %v451 = vadd.f32 %v449, %v450
    %v452 = vrot.slane %v451, 2
    %v453 = vadd.f32 %v451, %v452
    %v454 = vrot.slane %v453, 1
    %v455 = vadd.f32 %v453, %v454
    %v456 = vmul.f32 %v455, %v261
    %v457 = vmul.f32 %v442, %v442
    %v458 = vsub.f32 %v456, %v457
    %v459 = vsub.f32 %v429, %v442
    %v460 = vsub.f32 %v430, %v442
    %v461 = vsub.f32 %v431, %v442
    %v462 = vsub.f32 %v432, %v442
    %v463 = vadd.f32 %v458, 1e-05
    %v464 = vrsqrt.pop %v463
    %v465 = vmul.f32 %v464, %v463
    %v466 = vmul.f32 %v465, %v464
    %v467 = vmul.f32 0.5, %v466
    %v468 = vsub.f32 1.5, %v467
    %v469 = vmul.f32 %v464, %v468
    %vm470 = vweird.f32 %v463
    %vm471 = vweird.f32 %v464
    %vm472 = vmor %vm470, %vm471
    %v473 = vsel %vm472, %v464, %v469
    %v474 = vmul.f32 %v459, %v473
    %v475 = vmul.f32 %v460, %v473
    %v476 = vmul.f32 %v461, %v473
    %v477 = vmul.f32 %v462, %v473
    %v478 = vperm.slane %v107, 4
    %v479 = vmul.f32 %v474, %v478
    %v480 = vmul.f32 %v475, %v478
    %v481 = vmul.f32 %v476, %v478
    %v482 = vmul.f32 %v477, %v478
    %v483 = vperm.slane %v107, 5
    %v484 = vadd.f32 %v479, %v483
    %v485 = vadd.f32 %v480, %v483
    %v486 = vadd.f32 %v481, %v483
    %v487 = vadd.f32 %v482, %v483
    %488 = vmatpush.msra.mxu0 0.0
    %489 = vmatpush.msra.mxu0 0.0
    %490 = vmatpush.msra.mxu0 0.0
    %491 = vmatpush.msra.mxu0 0.0
    %492 = vmatpush.msra.mxu0 0.0
    %493 = vmatpush.msra.mxu0 0.0
    %494 = vmatpush.msra.mxu0 0.0
    %495 = vmatpush.msra.mxu0 0.0
    %496 = vmatpush.msra.mxu0 0.0
    %497 = vmatpush.msra.mxu0 0.0
    %498 = vmatpush.msra.mxu0 0.0
    %499 = vmatpush.msra.mxu0 0.0
    %500 = vmatpush.msra.mxu0 %v487
    %501 = vmatpush.msra.mxu0 %v486
    %502 = vmatpush.msra.mxu0 %v485
    %503 = vmatpush.msra.mxu0 %v484
    %504 = vmatmul.f32.gmra.mxu0 %v111
    %v505 = vpop.f32.mrf.mxu0
    %v506 = vadd.f32 0.0, %v505
    %507 = vmatmul.f32.gmra.mxu0 %v114
    %v508 = vpop.f32.mrf.mxu0
    %v509 = vadd.f32 0.0, %v508
    %510 = vmatmul.f32.gmra.mxu0 %v117
    %v511 = vpop.f32.mrf.mxu0
    %v512 = vadd.f32 0.0, %v511
    %513 = vmatmul.f32.gmra.mxu0 %v120
    %v514 = vpop.f32.mrf.mxu0
    %v515 = vadd.f32 0.0, %v514
    %516 = vdwg.mxu0
    %s517 = scalar_lea.vmem [#allocation7], 512
    %v518 = vld [vmem:[%s517] sm:$0xff]
    %v519 = vld [vmem:[%s517 + $0x8] sm:$0xff]
    %v520 = vld [vmem:[%s517 + $0x10] sm:$0xff]
    %v521 = vld [vmem:[%s517 + $0x18] sm:$0xff]
    %v522 = vld [vmem:[%s517 + $0x20] sm:$0xff]
    %v523 = vld [vmem:[%s517 + $0x28] sm:$0xff]
    %v524 = vld [vmem:[%s517 + $0x30] sm:$0xff]
    %v525 = vld [vmem:[%s517 + $0x38] sm:$0xff]
    %v526 = vld [vmem:[%s517 + $0x40] sm:$0xff]
    %v527 = vld [vmem:[%s517 + $0x48] sm:$0xff]
    %v528 = vld [vmem:[%s517 + $0x50] sm:$0xff]
    %v529 = vld [vmem:[%s517 + $0x58] sm:$0xff]
    %v530 = vld [vmem:[%s517 + $0x60] sm:$0xff]
    %v531 = vld [vmem:[%s517 + $0x68] sm:$0xff]
    %v532 = vld [vmem:[%s517 + $0x70] sm:$0xff]
    %v533 = vld [vmem:[%s517 + $0x78] sm:$0xff]
    %v534 = vld [vmem:[%s517 + $0x80] sm:$0xff]
    %v535 = vld [vmem:[%s517 + $0x88] sm:$0xff]
    %v536 = vld [vmem:[%s517 + $0x90] sm:$0xff]
    %v537 = vld [vmem:[%s517 + $0x98] sm:$0xff]
    %v538 = vld [vmem:[%s517 + $0xa0] sm:$0xff]
    %v539 = vld [vmem:[%s517 + $0xa8] sm:$0xff]
    %v540 = vld [vmem:[%s517 + $0xb0] sm:$0xff]
    %v541 = vld [vmem:[%s517 + $0xb8] sm:$0xff]
    %v542 = vld [vmem:[%s517 + $0xc0] sm:$0xff]
    %v543 = vld [vmem:[%s517 + $0xc8] sm:$0xff]
    %v544 = vld [vmem:[%s517 + $0xd0] sm:$0xff]
    %v545 = vld [vmem:[%s517 + $0xd8] sm:$0xff]
    %v546 = vld [vmem:[%s517 + $0xe0] sm:$0xff]
    %v547 = vld [vmem:[%s517 + $0xe8] sm:$0xff]
    %v548 = vld [vmem:[%s517 + $0xf0] sm:$0xff]
    %v549 = vld [vmem:[%s517 + $0xf8] sm:$0xff]
    %v550 = vperm.slane %v107, 6
    %551 = vmatpush.msra.mxu0 %v533
    %552 = vmatpush.msra.mxu0 %v532
    %553 = vmatpush.msra.mxu0 %v531
    %554 = vmatpush.msra.mxu0 %v530
    %555 = vmatpush.msra.mxu0 %v529
    %556 = vmatpush.msra.mxu0 %v528
    %557 = vmatpush.msra.mxu0 %v527
    %558 = vmatpush.msra.mxu0 %v526
    %559 = vmatpush.msra.mxu0 %v525
    %560 = vmatpush.msra.mxu0 %v524
    %561 = vmatpush.msra.mxu0 %v523
    %562 = vmatpush.msra.mxu0 %v522
    %563 = vmatpush.msra.mxu0 %v521
    %564 = vmatpush.msra.mxu0 %v520
    %565 = vmatpush.msra.mxu0 %v519
    %566 = vmatpush.msra.mxu0 %v518
    %567 = vmatmul.f32.gmra.mxu0 %v506
    %v568 = vpop.f32.mrf.mxu0
    %v569 = vadd.f32 %v550, %v568
    %570 = vmatmul.f32.gmra.mxu0 %v509
    %v571 = vpop.f32.mrf.mxu0
    %v572 = vadd.f32 %v550, %v571
    %573 = vmatmul.f32.gmra.mxu0 %v512
    %v574 = vpop.f32.mrf.mxu0
    %v575 = vadd.f32 %v550, %v574
    %576 = vmatmul.f32.gmra.mxu0 %v515
    %v577 = vpop.f32.mrf.mxu0
    %v578 = vadd.f32 %v550, %v577
    %579 = vdwg.mxu0
    %580 = vmatpush.msra.mxu0 %v549
    %581 = vmatpush.msra.mxu0 %v548
    %582 = vmatpush.msra.mxu0 %v547
    %583 = vmatpush.msra.mxu0 %v546
    %584 = vmatpush.msra.mxu0 %v545
    %585 = vmatpush.msra.mxu0 %v544
    %586 = vmatpush.msra.mxu0 %v543
    %587 = vmatpush.msra.mxu0 %v542
    %588 = vmatpush.msra.mxu0 %v541
    %589 = vmatpush.msra.mxu0 %v540
    %590 = vmatpush.msra.mxu0 %v539
    %591 = vmatpush.msra.mxu0 %v538
    %592 = vmatpush.msra.mxu0 %v537
    %593 = vmatpush.msra.mxu0 %v536
    %594 = vmatpush.msra.mxu0 %v535
    %595 = vmatpush.msra.mxu0 %v534
    %596 = vmatmul.f32.gmra.mxu0 %v484
    %v597 = vpop.f32.mrf.mxu0
    %v598 = vadd.f32 %v569, %v597
    %599 = vmatmul.f32.gmra.mxu0 %v485
    %v600 = vpop.f32.mrf.mxu0
    %v601 = vadd.f32 %v572, %v600
    %602 = vmatmul.f32.gmra.mxu0 %v486
    %v603 = vpop.f32.mrf.mxu0
    %v604 = vadd.f32 %v575, %v603
    %605 = vmatmul.f32.gmra.mxu0 %v487
    %v606 = vpop.f32.mrf.mxu0
    %v607 = vadd.f32 %v578, %v606
    %608 = vdwg.mxu0
    %v609 = vmax.f32 %v598, 0.0
    %v610 = vmax.f32 %v601, 0.0
    %v611 = vmax.f32 %v604, 0.0
    %v612 = vmax.f32 %v607, 0.0
    %v613 = vadd.f32 %v609, %v610
    %v614 = vadd.f32 %v613, %v611
    %v615 = vadd.f32 %v614, %v612
    %v616 = vrot.slane %v615, 4
    %v617 = vadd.f32 %v615, %v616
    %v618 = vrot.slane %v617, 2
    %v619 = vadd.f32 %v617, %v618
    %v620 = vrot.slane %v619, 1
    %v621 = vadd.f32 %v619, %v620
    %v622 = vmul.f32 %v621, %v261
    %v623 = vmul.f32 %v609, %v609
    %v624 = vmul.f32 %v610, %v610
    %v625 = vmul.f32 %v611, %v611
    %v626 = vmul.f32 %v612, %v612
    %v627 = vadd.f32 %v623, %v624
    %v628 = vadd.f32 %v627, %v625
    %v629 = vadd.f32 %v628, %v626
    %v630 = vrot.slane %v629, 4
    %v631 = vadd.f32 %v629, %v630
    %v632 = vrot.slane %v631, 2
    %v633 = vadd.f32 %v631, %v632
    %v634 = vrot.slane %v633, 1
    %v635 = vadd.f32 %v633, %v634
    %v636 = vmul.f32 %v635, %v261
    %v637 = vmul.f32 %v622, %v622
    %v638 = vsub.f32 %v636, %v637
    %v639 = vsub.f32 %v609, %v622
    %v640 = vsub.f32 %v610, %v622
    %v641 = vsub.f32 %v611, %v622
    %v642 = vsub.f32 %v612, %v622
    %v643 = vadd.f32 %v638, 1e-05
    %v644 = vrsqrt.pop %v643
    %v645 = vmul.f32 %v644, %v643
    %v646 = vmul.f32 %v645, %v644
    %v647 = vmul.f32 0.5, %v646
    %v648 = vsub.f32 1.5, %v647
    %v649 = vmul.f32 %v644, %v648
    %vm650 = vweird.f32 %v643
    %vm651 = vweird.f32 %v644
    %vm652 = vmor %vm650, %vm651
    %v653 = vsel %vm652, %v644, %v649
    %v654 = vmul.f32 %v639, %v653
    %v655 = vmul.f32 %v640, %v653
    %v656 = vmul.f32 %v641, %v653
    %v657 = vmul.f32 %v642, %v653
    %v658 = vperm.slane %v107, 7
    %v659 = vmul.f32 %v654, %v658
    %v660 = vmul.f32 %v655, %v658
    %v661 = vmul.f32 %v656, %v658
    %v662 = vmul.f32 %v657, %v658
    %v663 = vperm.slane %v108, 0
    %v664 = vadd.f32 %v659, %v663
    %v665 = vadd.f32 %v660, %v663
    %v666 = vadd.f32 %v661, %v663
    %v667 = vadd.f32 %v662, %v663
    %v668 = vld [vmem:[#allocation8] sm:$0xff]
    %v669 = vld [vmem:[#allocation8 + $0x8] sm:$0xff]
    %v670 = vld [vmem:[#allocation8 + $0x10] sm:$0xff]
    %v671 = vld [vmem:[#allocation8 + $0x18] sm:$0xff]
    %v672 = vld [vmem:[#allocation8 + $0x20] sm:$0xff]
    %v673 = vld [vmem:[#allocation8 + $0x28] sm:$0xff]
    %v674 = vld [vmem:[#allocation8 + $0x30] sm:$0xff]
    %v675 = vld [vmem:[#allocation8 + $0x38] sm:$0xff]
    %v676 = vld [vmem:[#allocation8 + $0x40] sm:$0xff]
    %v677 = vld [vmem:[#allocation8 + $0x48] sm:$0xff]
    %v678 = vld [vmem:[#allocation8 + $0x50] sm:$0xff]
    %v679 = vld [vmem:[#allocation8 + $0x58] sm:$0xff]
    %v680 = vld [vmem:[#allocation8 + $0x60] sm:$0xff]
    %v681 = vld [vmem:[#allocation8 + $0x68] sm:$0xff]
    %v682 = vld [vmem:[#allocation8 + $0x70] sm:$0xff]
    %v683 = vld [vmem:[#allocation8 + $0x78] sm:$0xff]
    %v684 = vld [vmem:[#allocation8 + $0x80] sm:$0xff]
    %v685 = vld [vmem:[#allocation8 + $0x88] sm:$0xff]
    %v686 = vld [vmem:[#allocation8 + $0x90] sm:$0xff]
    %v687 = vld [vmem:[#allocation8 + $0x98] sm:$0xff]
    %v688 = vld [vmem:[#allocation8 + $0xa0] sm:$0xff]
    %v689 = vld [vmem:[#allocation8 + $0xa8] sm:$0xff]
    %v690 = vld [vmem:[#allocation8 + $0xb0] sm:$0xff]
    %v691 = vld [vmem:[#allocation8 + $0xb8] sm:$0xff]
    %v692 = vld [vmem:[#allocation8 + $0xc0] sm:$0xff]
    %v693 = vld [vmem:[#allocation8 + $0xc8] sm:$0xff]
    %v694 = vld [vmem:[#allocation8 + $0xd0] sm:$0xff]
    %v695 = vld [vmem:[#allocation8 + $0xd8] sm:$0xff]
    %v696 = vld [vmem:[#allocation8 + $0xe0] sm:$0xff]
    %v697 = vld [vmem:[#allocation8 + $0xe8] sm:$0xff]
    %v698 = vld [vmem:[#allocation8 + $0xf0] sm:$0xff]
    %v699 = vld [vmem:[#allocation8 + $0xf8] sm:$0xff]
    %v700 = vld [vmem:[#allocation8 + $0x100] sm:$0xff]
    %v701 = vld [vmem:[#allocation8 + $0x108] sm:$0xff]
    %v702 = vld [vmem:[#allocation8 + $0x110] sm:$0xff]
    %v703 = vld [vmem:[#allocation8 + $0x118] sm:$0xff]
    %v704 = vld [vmem:[#allocation8 + $0x120] sm:$0xff]
    %v705 = vld [vmem:[#allocation8 + $0x128] sm:$0xff]
    %v706 = vld [vmem:[#allocation8 + $0x130] sm:$0xff]
    %v707 = vld [vmem:[#allocation8 + $0x138] sm:$0xff]
    %v708 = vld [vmem:[#allocation8 + $0x140] sm:$0xff]
    %v709 = vld [vmem:[#allocation8 + $0x148] sm:$0xff]
    %v710 = vld [vmem:[#allocation8 + $0x150] sm:$0xff]
    %v711 = vld [vmem:[#allocation8 + $0x158] sm:$0xff]
    %v712 = vld [vmem:[#allocation8 + $0x160] sm:$0xff]
    %v713 = vld [vmem:[#allocation8 + $0x168] sm:$0xff]
    %v714 = vld [vmem:[#allocation8 + $0x170] sm:$0xff]
    %v715 = vld [vmem:[#allocation8 + $0x178] sm:$0xff]
    %v716 = vperm.slane %v108, 1
    %717 = vmatpush.msra.mxu0 %v683
    %718 = vmatpush.msra.mxu0 %v682
    %719 = vmatpush.msra.mxu0 %v681
    %720 = vmatpush.msra.mxu0 %v680
    %721 = vmatpush.msra.mxu0 %v679
    %722 = vmatpush.msra.mxu0 %v678
    %723 = vmatpush.msra.mxu0 %v677
    %724 = vmatpush.msra.mxu0 %v676
    %725 = vmatpush.msra.mxu0 %v675
    %726 = vmatpush.msra.mxu0 %v674
    %727 = vmatpush.msra.mxu0 %v673
    %728 = vmatpush.msra.mxu0 %v672
    %729 = vmatpush.msra.mxu0 %v671
    %730 = vmatpush.msra.mxu0 %v670
    %731 = vmatpush.msra.mxu0 %v669
    %732 = vmatpush.msra.mxu0 %v668
    %733 = vmatmul.f32.gmra.mxu0 %v304
    %v734 = vpop.f32.mrf.mxu0
    %v735 = vadd.f32 %v716, %v734
    %736 = vmatmul.f32.gmra.mxu0 %v305
    %v737 = vpop.f32.mrf.mxu0
    %v738 = vadd.f32 %v716, %v737
    %739 = vmatmul.f32.gmra.mxu0 %v306
    %v740 = vpop.f32.mrf.mxu0
    %v741 = vadd.f32 %v716, %v740
    %742 = vmatmul.f32.gmra.mxu0 %v307
    %v743 = vpop.f32.mrf.mxu0
    %v744 = vadd.f32 %v716, %v743
    %745 = vdwg.mxu0
    %746 = vmatpush.msra.mxu0 %v699
    %747 = vmatpush.msra.mxu0 %v698
    %748 = vmatpush.msra.mxu0 %v697
    %749 = vmatpush.msra.mxu0 %v696
    %750 = vmatpush.msra.mxu0 %v695
    %751 = vmatpush.msra.mxu0 %v694
    %752 = vmatpush.msra.mxu0 %v693
    %753 = vmatpush.msra.mxu0 %v692
    %754 = vmatpush.msra.mxu0 %v691
    %755 = vmatpush.msra.mxu0 %v690
    %756 = vmatpush.msra.mxu0 %v689
    %757 = vmatpush.msra.mxu0 %v688
    %758 = vmatpush.msra.mxu0 %v687
    %759 = vmatpush.msra.mxu0 %v686
    %760 = vmatpush.msra.mxu0 %v685
    %761 = vmatpush.msra.mxu0 %v684
    %762 = vmatmul.f32.gmra.mxu0 %v484
    %v763 = vpop.f32.mrf.mxu0
    %v764 = vadd.f32 %v735, %v763
    %765 = vmatmul.f32.gmra.mxu0 %v485
    %v766 = vpop.f32.mrf.mxu0
    %v767 = vadd.f32 %v738, %v766
    %768 = vmatmul.f32.gmra.mxu0 %v486
    %v769 = vpop.f32.mrf.mxu0
    %v770 = vadd.f32 %v741, %v769
    %771 = vmatmul.f32.gmra.mxu0 %v487
    %v772 = vpop.f32.mrf.mxu0
    %v773 = vadd.f32 %v744, %v772
    %774 = vdwg.mxu0
    %775 = vmatpush.msra.mxu0 %v715
    %776 = vmatpush.msra.mxu0 %v714
    %777 = vmatpush.msra.mxu0 %v713
    %778 = vmatpush.msra.mxu0 %v712
    %779 = vmatpush.msra.mxu0 %v711
    %780 = vmatpush.msra.mxu0 %v710
    %781 = vmatpush.msra.mxu0 %v709
    %782 = vmatpush.msra.mxu0 %v708
    %783 = vmatpush.msra.mxu0 %v707
    %784 = vmatpush.msra.mxu0 %v706
    %785 = vmatpush.msra.mxu0 %v705
    %786 = vmatpush.msra.mxu0 %v704
    %787 = vmatpush.msra.mxu0 %v703
    %788 = vmatpush.msra.mxu0 %v702
    %789 = vmatpush.msra.mxu0 %v701
    %790 = vmatpush.msra.mxu0 %v700
    %791 = vmatmul.f32.gmra.mxu0 %v664
    %v792 = vpop.f32.mrf.mxu0
    %v793 = vadd.f32 %v764, %v792
    %794 = vmatmul.f32.gmra.mxu0 %v665
    %v795 = vpop.f32.mrf.mxu0
    %v796 = vadd.f32 %v767, %v795
    %797 = vmatmul.f32.gmra.mxu0 %v666
    %v798 = vpop.f32.mrf.mxu0
    %v799 = vadd.f32 %v770, %v798
    %800 = vmatmul.f32.gmra.mxu0 %v667
    %v801 = vpop.f32.mrf.mxu0
    %v802 = vadd.f32 %v773, %v801
    %803 = vdwg.mxu0
    %v804 = vmax.f32 %v793, 0.0
    %v805 = vmax.f32 %v796, 0.0
    %v806 = vmax.f32 %v799, 0.0
    %v807 = vmax.f32 %v802, 0.0
    %808 = vst [vmem:[#allocation11] sm:$0xff] %v804
    %809 = vst [vmem:[#allocation11 + $0x8] sm:$0xff] %v805
    %810 = vst [vmem:[#allocation11 + $0x10] sm:$0xff] %v806
    %811 = vst [vmem:[#allocation11 + $0x18] sm:$0xff] %v807
    // Predicated region
    $region42: #{tpu_custom_call.1} parent=1 // pred_check
      _
    $region43: #{tpu_custom_call.1} parent=1 // pred_check_branch
      %813 = sbr.rel (0) target = $region45
    $region44: #{tpu_custom_call.1} parent=1 // pred_region
      %815 = vsyncadd [#allocation4], 0
      %s816 = sshll.u32 [#allocation11], 4
      %s817 = int_to_ptr.vmem [resolvable:$true] %s816
      %s818 = sshll.u32 %s5, 4
      %s819 = int_to_ptr.hbm [resolvable:$true] %s818
      %824 = dma.vmem_to_hbm [thread:$0]  %s817, 512, %s819, [#allocation4], 128, 128, 8
    $region45: #{tpu_custom_call.1} parent=1 // pred_fallthru
      _
    // Predicated region
    $region46: #{tpu_custom_call.1} parent=1 // pred_check
      _
    $region47: #{tpu_custom_call.1} parent=1 // pred_check_branch
      %826 = sbr.rel (0) target = $region49
    $region48: #{tpu_custom_call.1} parent=1 // pred_region
      %828 = dma.done [#allocation4], 512
    $region49: #{tpu_custom_call.1} parent=1 // pred_fallthru
      _
    %829 = vsyncpa [#allocation3], 1
    %830 = vsyncpa [#allocation6], 1
    %831 = vsyncpa [#allocation9], 1
    %832 = vsyncpa [#allocation4], 1

</llo_original>
